<compile_context>
chip_gen: v7x
topology: tpu7x:2x2x1
jax: 0.10.0
libtpu: 0.0.40
codegen_flags: <defaults>
</compile_context>

<pallas_src>
import functools
import math

import jax
import jax.numpy as jnp
from jax.experimental import pallas as pl
from jax.experimental.pallas import tpu as pltpu


# ----------------------------------------------------------------------------
# Tile helpers
# ----------------------------------------------------------------------------

def _pick_tile(dim, target, align):
    """Largest tile <= target that divides `dim` and is a multiple of `align`;
    falls back to the full dim (always legal for a BlockSpec)."""
    if dim <= target:
        return dim
    t = (target // align) * align
    while t >= align:
        if dim % t == 0:
            return t
        t -= align
    return dim


# ----------------------------------------------------------------------------
# Tiled linear kernels (bf16 MXU operands, f32 accumulation)
# ----------------------------------------------------------------------------

def _linear_kernel(x_ref, w_ref, b_ref, o_ref, acc_ref, *, activation):
    @pl.when(pl.program_id(2) == 0)
    def _():
        acc_ref[...] = jnp.zeros_like(acc_ref)

    acc_ref[...] += jnp.dot(x_ref[...].astype(jnp.bfloat16),
                            w_ref[...].astype(jnp.bfloat16),
                            preferred_element_type=jnp.float32)

    @pl.when(pl.program_id(2) == pl.num_programs(2) - 1)
    def _():
        y = acc_ref[...] + b_ref[...]
        if activation == "relu":
            y = jnp.maximum(y, 0.0)
        o_ref[...] = y.astype(o_ref.dtype)


def _linear_res_ln_kernel(x_ref, w_ref, b_ref, r_ref, g_ref, bb_ref,
                          o_ref, acc_ref, *, eps):
    # o = LayerNorm(residual + x @ w + b) * gamma + beta   (post-norm sublayer, fused)
    @pl.when(pl.program_id(2) == 0)
    def _():
        acc_ref[...] = jnp.zeros_like(acc_ref)

    acc_ref[...] += jnp.dot(x_ref[...].astype(jnp.bfloat16),
                            w_ref[...].astype(jnp.bfloat16),
                            preferred_element_type=jnp.float32)

    @pl.when(pl.program_id(2) == pl.num_programs(2) - 1)
    def _():
        y = acc_ref[...] + b_ref[...] + r_ref[...].astype(jnp.float32)
        mu = jnp.mean(y, axis=-1, keepdims=True)
        var = jnp.mean((y - mu) * (y - mu), axis=-1, keepdims=True)
        o_ref[...] = ((y - mu) * jax.lax.rsqrt(var + eps) * g_ref[...]
                      + bb_ref[...]).astype(o_ref.dtype)


def linear(x, w, b, *, activation=None, out_dtype=jnp.bfloat16,
           residual=None, ln_gamma=None, ln_beta=None,
           tm_target=512, tn_target=512, tk_target=512):
    """Tiled y = act(x @ w + b), optionally fused with residual-add + LayerNorm."""
    M, K = x.shape
    N = w.shape[1]
    fuse_ln = ln_gamma is not None

    tm = _pick_tile(M, tm_target, 8)
    tk = _pick_tile(K, tk_target, 128)
    tn = N if fuse_ln else _pick_tile(N, tn_target, 128)  # LN needs the full row
    grid = (M // tm, N // tn, K // tk)

    x_spec = pl.BlockSpec((tm, tk), lambda i, j, k: (i, k))
    w_spec = pl.BlockSpec((tk, tn), lambda i, j, k: (k, j))
    v_spec = pl.BlockSpec((1, tn), lambda i, j, k: (0, j))   # bias / gamma / beta rows
    o_spec = pl.BlockSpec((tm, tn), lambda i, j, k: (i, j))
    cp = pltpu.CompilerParams(
        dimension_semantics=("parallel", "parallel", "arbitrary"))
    scratch = [pltpu.VMEM((tm, tn), jnp.float32)]
    b2 = b.reshape(1, N).astype(jnp.float32)

    if fuse_ln:
        r_spec = pl.BlockSpec((tm, tn), lambda i, j, k: (i, j))
        return pl.pallas_call(
            functools.partial(_linear_res_ln_kernel, eps=1e-5),
            grid=grid,
            in_specs=[x_spec, w_spec, v_spec, r_spec, v_spec, v_spec],
            out_specs=o_spec,
            out_shape=jax.ShapeDtypeStruct((M, N), out_dtype),
            scratch_shapes=scratch,
            compiler_params=cp,
        )(x, w, b2, residual,
          ln_gamma.reshape(1, N).astype(jnp.float32),
          ln_beta.reshape(1, N).astype(jnp.float32))

    return pl.pallas_call(
        functools.partial(_linear_kernel, activation=activation),
        grid=grid,
        in_specs=[x_spec, w_spec, v_spec],
        out_specs=o_spec,
        out_shape=jax.ShapeDtypeStruct((M, N), out_dtype),
        scratch_shapes=scratch,
        compiler_params=cp,
    )(x, w, b2)


# ----------------------------------------------------------------------------
# Flash-style multi-head attention: heads batched per grid step, causal block skip,
# leading-head scratch layout, single lane-dense output store.
# ----------------------------------------------------------------------------

def _mha_kernel(q_ref, k_ref, v_ref, o_ref, m_ref, l_ref, acc_ref,
                *, h, scale, mask_mode):
    qi = pl.program_id(1)
    ki = pl.program_id(2)
    tq = q_ref.shape[1]
    tk = k_ref.shape[1]
    D = q_ref.shape[2]
    dk = D // h

    @pl.when(ki == 0)
    def _():
        m_ref[...] = jnp.full_like(m_ref, -1e30)
        l_ref[...] = jnp.zeros_like(l_ref)
        acc_ref[...] = jnp.zeros_like(acc_ref)

    def compute():
        q = q_ref[0].astype(jnp.bfloat16)   # (tq, D)
        k = k_ref[0].astype(jnp.bfloat16)   # (tk, D)
        v = v_ref[0].astype(jnp.bfloat16)   # (tk, D)
        # Head split: (t, h*dk) -> (h, t, dk) via static lane slices stacked on a new
        # leading (major) axis; one batched einsum replaces h tiny matmuls.
        qh = jnp.stack([q[:, i * dk:(i + 1) * dk] for i in range(h)], axis=0)
        kh = jnp.stack([k[:, i * dk:(i + 1) * dk] for i in range(h)], axis=0)
        vh = jnp.stack([v[:, i * dk:(i + 1) * dk] for i in range(h)], axis=0)

        s = jnp.einsum("hqd,hkd->hqk", qh, kh,
                       preferred_element_type=jnp.float32) * scale   # (h, tq, tk)
        if mask_mode == "causal":
            # Mask generated in-kernel (no dense HBM bias tensor).
            q_idx = qi * tq + jax.lax.broadcasted_iota(jnp.int32, (tq, tk), 0)
            k_idx = ki * tk + jax.lax.broadcasted_iota(jnp.int32, (tq, tk), 1)
            s = jnp.where((q_idx >= k_idx)[None, :, :], s, -1e30)

        m_prev = m_ref[...]                                           # (h, tq, 1)
        m_new = jnp.maximum(m_prev, jnp.max(s, axis=-1, keepdims=True))
        alpha = jnp.exp(m_prev - m_new)                               # (h, tq, 1)
        p = jnp.exp(s - m_new)                                        # (h, tq, tk)
        l_ref[...] = alpha * l_ref[...] + jnp.sum(p, axis=-1, keepdims=True)
        pv = jnp.einsum("hqk,hkd->hqd", p.astype(jnp.bfloat16), vh,
                        preferred_element_type=jnp.float32)           # (h, tq, dk)
        acc_ref[...] = alpha * acc_ref[...] + pv
        m_ref[...] = m_new

    if mask_mode == "causal":
        # Skip fully-masked KV blocks entirely (finalize below still runs).
        pl.when(ki * tk <= qi * tq + tq - 1)(compute)
    else:
        compute()

    @pl.when(ki == pl.num_programs(2) - 1)
    def _():
        out = acc_ref[...] * pl.reciprocal(l_ref[...], approx=True)   # (h, tq, dk)
        o_ref[0] = jnp.concatenate([out[i] for i in range(h)],
                                   axis=-1).astype(o_ref.dtype)       # one dense store


def multihead_attention(q_in, k_in, v_in, h, d_model, mask_mode="none",
                        tq_target=128, tk_target=128):
    """q_in/k_in/v_in are (array, col_block) pairs.

    array is (B, S, c*D); col_block selects which D-wide column block to stream, so a
    packed QKV / KV projection output can be consumed without HBM slice copies.
    Output: (B, Sq, D) bf16.
    """
    q_arr, q_slot = q_in
    k_arr, k_slot = k_in
    v_arr, v_slot = v_in
    B, Sq = q_arr.shape[0], q_arr.shape[1]
    Sk = k_arr.shape[1]
    D = d_model
    dk = D // h
    tq = _pick_tile(Sq, tq_target, 8)
    tk = _pick_tile(Sk, tk_target, 8)
    grid = (B, Sq // tq, Sk // tk)

    return pl.pallas_call(
        functools.partial(_mha_kernel, h=h, scale=1.0 / math.sqrt(dk),
                          mask_mode=mask_mode),
        grid=grid,
        in_specs=[
            pl.BlockSpec((1, tq, D), lambda b, qi, ki: (b, qi, q_slot)),
            pl.BlockSpec((1, tk, D), lambda b, qi, ki: (b, ki, k_slot)),
            pl.BlockSpec((1, tk, D), lambda b, qi, ki: (b, ki, v_slot)),
        ],
        out_specs=pl.BlockSpec((1, tq, D), lambda b, qi, ki: (b, qi, 0)),
        out_shape=jax.ShapeDtypeStruct((B, Sq, D), jnp.bfloat16),
        scratch_shapes=[
            pltpu.VMEM((h, tq, 1), jnp.float32),    # running max  (leading-head layout)
            pltpu.VMEM((h, tq, 1), jnp.float32),    # running denom
            pltpu.VMEM((h, tq, dk), jnp.float32),   # output accumulator
        ],
        compiler_params=pltpu.CompilerParams(
            dimension_semantics=("parallel", "parallel", "arbitrary")),
    )(q_arr, k_arr, v_arr)


def _attend_packed_qkv(qkv_flat, B, S, D, h, mask_mode):
    """qkv_flat: (B*S, 3D).  Streams q/k/v straight from the packed projection."""
    if D % 128 == 0:
        a = qkv_flat.reshape(B, S, 3 * D)           # free reshape, no HBM copy
        return multihead_attention((a, 0), (a, 1), (a, 2), h, D, mask_mode)
    # Fallback for lane-unaligned D: materialize slices (extra HBM traffic).
    q = qkv_flat[:, :D].reshape(B, S, D)
    k = qkv_flat[:, D:2 * D].reshape(B, S, D)
    v = qkv_flat[:, 2 * D:].reshape(B, S, D)
    return multihead_attention((q, 0), (k, 0), (v, 0), h, D, mask_mode)


def _attend_cross(q_flat, kv_flat, B, Sq, Sk, D, h, mask_mode):
    q3 = q_flat.reshape(B, Sq, D)
    if D % 128 == 0:
        kv3 = kv_flat.reshape(B, Sk, 2 * D)         # free reshape, no HBM copy
        return multihead_attention((q3, 0), (kv3, 0), (kv3, 1), h, D, mask_mode)
    k3 = kv_flat[:, :D].reshape(B, Sk, D)
    v3 = kv_flat[:, D:].reshape(B, Sk, D)
    return multihead_attention((q3, 0), (k3, 0), (v3, 0), h, D, mask_mode)


# ----------------------------------------------------------------------------
# Row-tiled log-softmax (VMEM-budgeted tile so large vocabs fit on v7x)
# ----------------------------------------------------------------------------

def _log_softmax_kernel(x_ref, o_ref):
    x = x_ref[...].astype(jnp.float32)
    m = jnp.max(x, axis=-1, keepdims=True)
    z = x - m
    lse = jnp.log(jnp.sum(jnp.exp(z), axis=-1, keepdims=True))
    o_ref[...] = (z - lse).astype(o_ref.dtype)


def log_softmax(x, vmem_budget_bytes=8 * 1024 * 1024):
    M, V = x.shape
    # Double-buffered input (x.dtype) + output (f32) per row of V elements.
    bytes_per_row = (x.dtype.itemsize + 4) * V * 2
    tm_target = max(8, (vmem_budget_bytes // max(bytes_per_row, 1)) // 8 * 8)
    tm = _pick_tile(M, min(tm_target, 512), 8)
    return pl.pallas_call(
        _log_softmax_kernel,
        grid=(M // tm,),
        in_specs=[pl.BlockSpec((tm, V), lambda i: (i, 0))],
        out_specs=pl.BlockSpec((tm, V), lambda i: (i, 0)),
        out_shape=jax.ShapeDtypeStruct((M, V), jnp.float32),
        compiler_params=pltpu.CompilerParams(dimension_semantics=("parallel",)),
    )(x)


# ----------------------------------------------------------------------------
# Model glue (embeddings / reshapes / parameter bookkeeping in plain JAX)
# ----------------------------------------------------------------------------

def sinusoidal_positional_embedding(seq_len, d_model):
    pos = jnp.arange(seq_len, dtype=jnp.float32)[:, None]
    i = jnp.arange(0, d_model, 2, dtype=jnp.float32)
    div = jnp.exp(-jnp.log(10000.0) * i / d_model)
    pe = jnp.zeros((seq_len, d_model), jnp.float32)
    pe = pe.at[:, 0::2].set(jnp.sin(pos * div))
    pe = pe.at[:, 1::2].set(jnp.cos(pos * div))
    return pe


def encoder_layer(x, p, h):
    B, S, D = x.shape
    M = B * S
    xf = x.reshape(M, D)

    # Fused QKV projection (one matmul), bf16 output feeds the attention MXU directly.
    qkv = linear(xf, p["self_attn"]["wqkv"], p["self_attn"]["bqkv"],
                 out_dtype=jnp.bfloat16)
    attn = _attend_packed_qkv(qkv, B, S, D, h, "none").reshape(M, D)

    # Output projection fused with residual-add + LayerNorm (bf16 activations out).
    x1 = linear(attn, p["self_attn"]["wo"], p["self_attn"]["bo"],
                residual=xf, ln_gamma=p["ln1_g"], ln_beta=p["ln1_b"],
                out_dtype=jnp.bfloat16)

    # FFN: first linear with fused ReLU, second fused with residual-add + LayerNorm.
    h1 = linear(x1, p["ffn"]["w1"], p["ffn"]["b1"],
                activation="relu", out_dtype=jnp.bfloat16)
    x2 = linear(h1, p["ffn"]["w2"], p["ffn"]["b2"],
                residual=x1, ln_gamma=p["ln2_g"], ln_beta=p["ln2_b"],
                out_dtype=jnp.bfloat16)
    return x2.reshape(B, S, D)


def decoder_layer(x, memory, p, h, tgt_mode, src_mode):
    B, S, D = x.shape
    M = B * S
    Sm = memory.shape[1]
    xf = x.reshape(M, D)
    memf = memory.reshape(B * Sm, D)

    # Masked self-attention.
    qkv = linear(xf, p["self_attn"]["wqkv"], p["self_attn"]["bqkv"],
                 out_dtype=jnp.bfloat16)
    sa = _attend_packed_qkv(qkv, B, S, D, h, tgt_mode).reshape(M, D)
    x1 = linear(sa, p["self_attn"]["wo"], p["self_attn"]["bo"],
                residual=xf, ln_gamma=p["ln1_g"], ln_beta=p["ln1_b"],
                out_dtype=jnp.bfloat16)

    # Cross-attention (Q from decoder state, fused KV from encoder memory).
    qc = linear(x1, p["cross_attn"]["wq"], p["cross_attn"]["bq"],
                out_dtype=jnp.bfloat16)
    kv = linear(memf, p["cross_attn"]["wkv"], p["cross_attn"]["bkv"],
                out_dtype=jnp.bfloat16)
    ca = _attend_cross(qc, kv, B, S, Sm, D, h, src_mode).reshape(M, D)
    x2 = linear(ca, p["cross_attn"]["wo"], p["cross_attn"]["bo"],
                residual=x1, ln_gamma=p["ln2_g"], ln_beta=p["ln2_b"],
                out_dtype=jnp.bfloat16)

    # FFN.
    h1 = linear(x2, p["ffn"]["w1"], p["ffn"]["b1"],
                activation="relu", out_dtype=jnp.bfloat16)
    x3 = linear(h1, p["ffn"]["w2"], p["ffn"]["b2"],
                residual=x2, ln_gamma=p["ln3_g"], ln_beta=p["ln3_b"],
                out_dtype=jnp.bfloat16)
    return x3.reshape(B, S, D)


def transformer_forward(params, x_src, x_tgt, h, src_mask=None, tgt_mask="causal"):
    B, Ss = x_src.shape
    _, St = x_tgt.shape
    D = params["src_emb"].shape[1]
    V = params["final_w"].shape[1]

    # Embedding lookup (gather) + sinusoidal positional embedding -- plain JAX glue.
    # bf16 activations end-to-end into the layer stack.
    src = (jnp.take(params["src_emb"], x_src, axis=0)
           + sinusoidal_positional_embedding(Ss, D)[None]).astype(jnp.bfloat16)
    tgt = (jnp.take(params["tgt_emb"], x_tgt, axis=0)
           + sinusoidal_positional_embedding(St, D)[None]).astype(jnp.bfloat16)

    # Masks are generated inside the attention kernel (no dense HBM bias tensor).
    # TODO(synk): general boolean padding src_mask is not streamed; only None (attend
    # everywhere) and causal tgt masking are supported in-kernel.
    src_mode = "none"
    tgt_mode = "none" if tgt_mask is None else "causal"

    enc = src
    for lp in params["encoder_layers"]:
        enc = encoder_layer(enc, lp, h)

    dec = tgt
    for lp in params["decoder_layers"]:
        dec = decoder_layer(dec, enc, lp, h, tgt_mode, src_mode)

    logits = linear(dec.reshape(B * St, D), params["final_w"], params["final_b"],
                    out_dtype=jnp.bfloat16)
    return log_softmax(logits).reshape(B, St, V)


# ----------------------------------------------------------------------------
# Deterministic parameter initialization (matmul weights stored in bf16)
# ----------------------------------------------------------------------------

def init_params(key, d_model, h, d_ff, src_vocab, tgt_vocab, num_layers):
    keys = iter(jax.random.split(key, 1024))

    def dense(fan_in, fan_out):
        w = (jax.random.normal(next(keys), (fan_in, fan_out), jnp.float32)
             * 0.02).astype(jnp.bfloat16)
        b = jnp.zeros((fan_out,), jnp.float32)
        return w, b

    def self_attn_params():
        wqkv, bqkv = dense(d_model, 3 * d_model)
        wo, bo = dense(d_model, d_model)
        return dict(wqkv=wqkv, bqkv=bqkv, wo=wo, bo=bo)

    def cross_attn_params():
        wq, bq = dense(d_model, d_model)
        wkv, bkv = dense(d_model, 2 * d_model)
        wo, bo = dense(d_model, d_model)
        return dict(wq=wq, bq=bq, wkv=wkv, bkv=bkv, wo=wo, bo=bo)

    def ffn_params():
        w1, b1 = dense(d_model, d_ff)
        w2, b2 = dense(d_ff, d_model)
        return dict(w1=w1, b1=b1, w2=w2, b2=b2)

    def ln():
        return jnp.ones((d_model,), jnp.float32), jnp.zeros((d_model,), jnp.float32)

    enc_layers = []
    for _ in range(num_layers):
        g1, b1 = ln()
        g2, b2 = ln()
        enc_layers.append(dict(self_attn=self_attn_params(), ffn=ffn_params(),
                               ln1_g=g1, ln1_b=b1, ln2_g=g2, ln2_b=b2))

    dec_layers = []
    for _ in range(num_layers):
        g1, b1 = ln()
        g2, b2 = ln()
        g3, b3 = ln()
        dec_layers.append(dict(self_attn=self_attn_params(),
                               cross_attn=cross_attn_params(),
                               ffn=ffn_params(),
                               ln1_g=g1, ln1_b=b1, ln2_g=g2, ln2_b=b2,
                               ln3_g=g3, ln3_b=b3))

    final_w, final_b = dense(d_model, tgt_vocab)
    return dict(
        src_emb=jax.random.normal(next(keys), (src_vocab, d_model), jnp.float32) * 0.02,
        tgt_emb=jax.random.normal(next(keys), (tgt_vocab, d_model), jnp.float32) * 0.02,
        encoder_layers=enc_layers,
        decoder_layers=dec_layers,
        final_w=final_w,
        final_b=final_b,
    )


# ----------------------------------------------------------------------------
# Demo
# ----------------------------------------------------------------------------

if __name__ == "__main__":
    # Small synthetic configuration (d_model a multiple of 128 exercises the
    # zero-copy packed-QKV attention path).
    d_model, h, d_ff = 128, 4, 256
    src_vocab, tgt_vocab = 50, 60
    num_layers = 2
    B, S_src, S_tgt = 2, 8, 8

    key = jax.random.PRNGKey(0)
    k_params, k_src, k_tgt = jax.random.split(key, 3)

    params = init_params(k_params, d_model, h, d_ff, src_vocab, tgt_vocab, num_layers)

    x_src = jax.random.randint(k_src, (B, S_src), 0, src_vocab, dtype=jnp.int32)
    x_tgt = jax.random.randint(k_tgt, (B, S_tgt), 0, tgt_vocab, dtype=jnp.int32)

    # TODO(synk): dropout is a no-op here (eval-mode forward pass only).
    out = transformer_forward(params, x_src, x_tgt, h,
                              src_mask=None, tgt_mask="causal")
    out = jax.block_until_ready(out)

    assert out.shape == (B, S_tgt, tgt_vocab)
    # log_softmax rows should sum (in prob space) to ~1
    assert jnp.allclose(jnp.sum(jnp.exp(out), axis=-1), 1.0, atol=1e-3)
    print("KERNEL_OK")
</pallas_src>

<mosaic_0001>
module attributes {stable_mosaic.version = 11 : i64} {
  func.func @_linear_kernel(%arg0: i32, %arg1: i32, %arg2: i32, %arg3: memref<16x128xbf16, #tpu.memory_space<vmem>>, %arg4: memref<128x384xbf16, #tpu.memory_space<vmem>>, %arg5: memref<1x384xf32, #tpu.memory_space<vmem>>, %arg6: memref<16x384xbf16, #tpu.memory_space<vmem>>, %arg7: memref<16x384xf32, #tpu.memory_space<vmem>>) attributes {dimension_semantics = [#tpu.dimension_semantics<parallel>, #tpu.dimension_semantics<parallel>, #tpu.dimension_semantics<arbitrary>], iteration_bounds = array<i64: 1, 1, 1>, scalar_prefetch = 0 : i64, scratch_operands = 1 : i64, tpu.core_type = #tpu.core_type<tc>, window_params = [{transform_indices = @transform_0, window_bounds = array<i64: 16, 128>}, {transform_indices = @transform_1, window_bounds = array<i64: 128, 384>}, {transform_indices = @transform_2, window_bounds = array<i64: 1, 384>}, {transform_indices = @transform_3, window_bounds = array<i64: 16, 384>}]} {
    %c0_i32 = arith.constant 0 : i32
    %0 = arith.cmpi eq, %arg2, %c0_i32 : i32
    %1 = arith.extui %0 : i1 to i32
    %c0_i32_0 = arith.constant 0 : i32
    %2 = arith.cmpi ne, %1, %c0_i32_0 : i32
    scf.if %2 {
      %cst_10 = arith.constant 0.000000e+00 : f32
      %12 = vector.broadcast %cst_10 : f32 to vector<16x384xf32>
      %c0_11 = arith.constant 0 : index
      %c0_12 = arith.constant 0 : index
      %13 = vector.load %arg7[%c0_11, %c0_12] : memref<16x384xf32, #tpu.memory_space<vmem>>, vector<16x384xf32>
      tpu.vector_store %arg7[%c0_11, %c0_12], %12 {strides = array<i32>} : memref<16x384xf32, #tpu.memory_space<vmem>>, vector<16x384xf32>,
    } else {
    }
    %c0 = arith.constant 0 : index
    %c0_1 = arith.constant 0 : index
    %3 = vector.load %arg7[%c0, %c0_1] : memref<16x384xf32, #tpu.memory_space<vmem>>, vector<16x384xf32>
    %c0_2 = arith.constant 0 : index
    %c0_3 = arith.constant 0 : index
    %4 = vector.load %arg3[%c0_2, %c0_3] : memref<16x128xbf16, #tpu.memory_space<vmem>>, vector<16x128xbf16>
    %c0_4 = arith.constant 0 : index
    %c0_5 = arith.constant 0 : index
    %5 = vector.load %arg4[%c0_4, %c0_5] : memref<128x384xbf16, #tpu.memory_space<vmem>>, vector<128x384xbf16>
    %cst = arith.constant dense<0.000000e+00> : vector<16x384xf32>
    %6 = tpu.matmul %4, %5, %cst {dimension_numbers = #tpu.dot_dimension_numbers<[1], [0], [0], [1], [0, 0, 1, 1], [], []>} : vector<16x128xbf16>, vector<128x384xbf16>, vector<16x384xf32> -> vector<16x384xf32>
    %7 = arith.addf %3, %6 : vector<16x384xf32>
    %c0_6 = arith.constant 0 : index
    %c0_7 = arith.constant 0 : index
    %8 = vector.load %arg7[%c0_6, %c0_7] : memref<16x384xf32, #tpu.memory_space<vmem>>, vector<16x384xf32>
    tpu.vector_store %arg7[%c0_6, %c0_7], %7 {strides = array<i32>} : memref<16x384xf32, #tpu.memory_space<vmem>>, vector<16x384xf32>,
    %c0_i32_8 = arith.constant 0 : i32
    %9 = arith.cmpi eq, %arg2, %c0_i32_8 : i32
    %10 = arith.extui %9 : i1 to i32
    %c0_i32_9 = arith.constant 0 : i32
    %11 = arith.cmpi ne, %10, %c0_i32_9 : i32
    scf.if %11 {
      %c0_10 = arith.constant 0 : index
      %c0_11 = arith.constant 0 : index
      %12 = vector.load %arg7[%c0_10, %c0_11] : memref<16x384xf32, #tpu.memory_space<vmem>>, vector<16x384xf32>
      %c0_12 = arith.constant 0 : index
      %c0_13 = arith.constant 0 : index
      %13 = vector.load %arg5[%c0_12, %c0_13] : memref<1x384xf32, #tpu.memory_space<vmem>>, vector<1x384xf32>
      %14 = vector.broadcast %13 : vector<1x384xf32> to vector<16x384xf32>
      %15 = arith.addf %12, %14 : vector<16x384xf32>
      %16 = arith.truncf %15 : vector<16x384xf32> to vector<16x384xbf16>
      %c0_14 = arith.constant 0 : index
      %c0_15 = arith.constant 0 : index
      %17 = vector.load %arg6[%c0_14, %c0_15] : memref<16x384xbf16, #tpu.memory_space<vmem>>, vector<16x384xbf16>
      tpu.vector_store %arg6[%c0_14, %c0_15], %16 {strides = array<i32>} : memref<16x384xbf16, #tpu.memory_space<vmem>>, vector<16x384xbf16>,
    } else {
    }
    return
  }
  func.func @transform_0(%arg0: i32, %arg1: i32, %arg2: i32) -> (i32, i32) {
    %c0_i32 = arith.constant 0 : i32
    return %arg0, %arg2 : i32, i32
  }
  func.func @transform_1(%arg0: i32, %arg1: i32, %arg2: i32) -> (i32, i32) {
    %c0_i32 = arith.constant 0 : i32
    return %arg2, %arg1 : i32, i32
  }
  func.func @transform_2(%arg0: i32, %arg1: i32, %arg2: i32) -> (i32, i32) {
    %c0_i32 = arith.constant 0 : i32
    %c0_i32_0 = arith.constant 0 : i32
    return %c0_i32, %arg1 : i32, i32
  }
  func.func @transform_3(%arg0: i32, %arg1: i32, %arg2: i32) -> (i32, i32) {
    %c0_i32 = arith.constant 0 : i32
    return %arg0, %arg1 : i32, i32
  }
}

</mosaic_0001>

<llo_original>
// kernel: tpu_custom_call.1
$region0: #{tpu_custom_call.1}
  #allocation0 [shape = 'u32[]', space=smem, size = 0x4, offset = 0x4, fixed_abs, tag = 'smem constant byte address 0x4 - core index']
  #allocation1 [shape = 'u32[144,128]{1,0:T(1,128)}', space=vmem, size = 0x12000, scoped, tag = 'internal scratch']
  #allocation2 [shape = 'f32[16,384]{1,0:T(8,128)}', space=vmem, size = 0x6000, scoped, tag = 'scratch operand']
  %s0 = inlined_call_operand.hbm [shape: bf16[16,128], index: 0, kind: input, shape index: {}]
  %s1 = inlined_call_operand.hbm [shape: bf16[128,384], index: 1, kind: input, shape index: {}]
  %s2 = inlined_call_operand.vmem [shape: f32[1,384], index: 2, kind: input, shape index: {}]
  %s3 = inlined_call_operand.hbm [shape: bf16[16,384], index: 3, kind: output, shape index: {}]
  %s4 = sld [smem:[#allocation0]]
  $region38: #{tpu_custom_call.1} parent=0
    _
  %s6 = ssub.s32 1, %s4
  %s7 = scalar_select 0, %s6, %s4
  $region1: #{tpu_custom_call.1} parent=0
    #allocation3 [shape = 'u8[4096]{0}', space=vmem, size = 0x1000, scoped, tag = 'input window, operand 0, single buffered']
    #allocation4 [shape = 's32[1]{0}', space=sflag, size = 0x4, scoped, tag = 'scoped memory for tpu_custom_call.1']
    #allocation5 [shape = 's32[1]{0}', space=sflag, size = 0x4, scoped, tag = 'scoped memory for tpu_custom_call.1']
    #allocation6 [shape = 'u8[98304]{0}', space=vmem, size = 0x18000, scoped, tag = 'input window, operand 1, single buffered']
    #allocation7 [shape = 's32[1]{0}', space=sflag, size = 0x4, scoped, tag = 'scoped memory for tpu_custom_call.1']
    #allocation8 [shape = 'u8[12288]{0}', space=vmem, size = 0x3000, scoped, tag = 'output window, operand 0, single buffered']
    %8 = vsyncpa [#allocation4], 0
    %9 = vsyncpa [#allocation7], 0
    %10 = vsyncpa [#allocation5], 0
    // Predicated region
    $region2: #{tpu_custom_call.1} parent=1 // pred_check
      _
    $region3: #{tpu_custom_call.1} parent=1 // pred_check_branch
      %12 = sbr.rel (0) target = $region5
    $region4: #{tpu_custom_call.1} parent=1 // pred_region
      %s14 = ssub.s32 128, 128
      %15 = vsyncadd [#allocation4], %s14
      %s16 = sshll.u32 [#allocation3], 4
      %s17 = int_to_ptr.vmem [resolvable:$true] %s16
      %22 = dma.hbm_to_vmem [thread:$0]  %s0, 128, %s17, [#allocation4], 64, 64, 4
    $region5: #{tpu_custom_call.1} parent=1 // pred_fallthru
      _
    // Predicated region
    $region6: #{tpu_custom_call.1} parent=1 // pred_check
      _
    $region7: #{tpu_custom_call.1} parent=1 // pred_check_branch
      %24 = sbr.rel (0) target = $region9
    $region8: #{tpu_custom_call.1} parent=1 // pred_region
      %s26 = ssub.s32 3072, 3072
      %27 = vsyncadd [#allocation7], %s26
      %s28 = sshll.u32 [#allocation6], 4
      %s29 = int_to_ptr.vmem [resolvable:$true] %s28
      %34 = dma.hbm_to_vmem [thread:$0]  %s1, 3072, %s29, [#allocation7], 192, 192, 12
    $region9: #{tpu_custom_call.1} parent=1 // pred_fallthru
      _
    // Predicated region
    $region10: #{tpu_custom_call.1} parent=1 // pred_check
      _
    $region11: #{tpu_custom_call.1} parent=1 // pred_check_branch
      %36 = sbr.rel (0) target = $region13
    $region12: #{tpu_custom_call.1} parent=1 // pred_region
      _
    $region13: #{tpu_custom_call.1} parent=1 // pred_fallthru
      _
    // Predicated region
    $region14: #{tpu_custom_call.1} parent=1 // pred_check
      _
    $region15: #{tpu_custom_call.1} parent=1 // pred_check_branch
      %38 = sbr.rel (0) target = $region17
    $region16: #{tpu_custom_call.1} parent=1 // pred_region
      %39 = dma.done [#allocation4], 128
    $region17: #{tpu_custom_call.1} parent=1 // pred_fallthru
      _
    // Predicated region
    $region18: #{tpu_custom_call.1} parent=1 // pred_check
      _
    $region19: #{tpu_custom_call.1} parent=1 // pred_check_branch
      %41 = sbr.rel (0) target = $region21
    $region20: #{tpu_custom_call.1} parent=1 // pred_region
      %42 = dma.done [#allocation7], 3072
    $region21: #{tpu_custom_call.1} parent=1 // pred_fallthru
      _
    %p44 = scmp.eq.s32.totalorder 0, 0
    // Predicated region
    $region22: #{tpu_custom_call.1} parent=1 // pred_check
      %p45 = pneg %p44
    $region23: #{tpu_custom_call.1} parent=1 // pred_check_branch
      %47 = sbr.rel (%p45) target = $region25
    $region24: #{tpu_custom_call.1} parent=1 // pred_region
      %48 = vst [vmem:[#allocation2] sm:$0xff] 0.0
      %49 = vst [vmem:[#allocation2 + $0x8] sm:$0xff] 0.0
      %50 = vst [vmem:[#allocation2 + $0x10] sm:$0xff] 0.0
      %51 = vst [vmem:[#allocation2 + $0x18] sm:$0xff] 0.0
      %52 = vst [vmem:[#allocation2 + $0x20] sm:$0xff] 0.0
      %53 = vst [vmem:[#allocation2 + $0x28] sm:$0xff] 0.0
    $region25: #{tpu_custom_call.1} parent=1 // pred_fallthru
      _
    %v54 = vld [vmem:[#allocation2] sm:$0xff]
    %v55 = vld [vmem:[#allocation2 + $0x8] sm:$0xff]
    %v56 = vld [vmem:[#allocation2 + $0x10] sm:$0xff]
    %v57 = vld [vmem:[#allocation2 + $0x18] sm:$0xff]
    %v58 = vld [vmem:[#allocation2 + $0x20] sm:$0xff]
    %v59 = vld [vmem:[#allocation2 + $0x28] sm:$0xff]
    %v60 = vld [vmem:[#allocation3] sm:$0xf]
    %v61 = vld [vmem:[#allocation3 + $0x4] sm:$0xf]
    %v62 = vld [vmem:[#allocation6] sm:$0xff]
    %v63 = vld [vmem:[#allocation6 + $0x8] sm:$0xf]
    %v64 = vld [vmem:[#allocation6 + $0xc] sm:$0xff]
    %v65 = vld [vmem:[#allocation6 + $0x14] sm:$0xf]
    %v66 = vld [vmem:[#allocation6 + $0x18] sm:$0xff]
    %v67 = vld [vmem:[#allocation6 + $0x20] sm:$0xf]
    %v68 = vld [vmem:[#allocation6 + $0x24] sm:$0xff]
    %v69 = vld [vmem:[#allocation6 + $0x2c] sm:$0xf]
    %v70 = vld [vmem:[#allocation6 + $0x30] sm:$0xff]
    %v71 = vld [vmem:[#allocation6 + $0x38] sm:$0xf]
    %v72 = vld [vmem:[#allocation6 + $0x3c] sm:$0xff]
    %v73 = vld [vmem:[#allocation6 + $0x44] sm:$0xf]
    %v74 = vld [vmem:[#allocation6 + $0x48] sm:$0xff]
    %v75 = vld [vmem:[#allocation6 + $0x50] sm:$0xf]
    %v76 = vld [vmem:[#allocation6 + $0x54] sm:$0xff]
    %v77 = vld [vmem:[#allocation6 + $0x5c] sm:$0xf]
    %v78 = vld [vmem:[#allocation6 + $0x60] sm:$0xff]
    %v79 = vld [vmem:[#allocation6 + $0x68] sm:$0xf]
    %v80 = vld [vmem:[#allocation6 + $0x6c] sm:$0xff]
    %v81 = vld [vmem:[#allocation6 + $0x74] sm:$0xf]
    %v82 = vld [vmem:[#allocation6 + $0x78] sm:$0xff]
    %v83 = vld [vmem:[#allocation6 + $0x80] sm:$0xf]
    %v84 = vld [vmem:[#allocation6 + $0x84] sm:$0xff]
    %v85 = vld [vmem:[#allocation6 + $0x8c] sm:$0xf]
    %v86 = vld [vmem:[#allocation6 + $0x90] sm:$0xff]
    %v87 = vld [vmem:[#allocation6 + $0x98] sm:$0xf]
    %v88 = vld [vmem:[#allocation6 + $0x9c] sm:$0xff]
    %v89 = vld [vmem:[#allocation6 + $0xa4] sm:$0xf]
    %v90 = vld [vmem:[#allocation6 + $0xa8] sm:$0xff]
    %v91 = vld [vmem:[#allocation6 + $0xb0] sm:$0xf]
    %v92 = vld [vmem:[#allocation6 + $0xb4] sm:$0xff]
    %v93 = vld [vmem:[#allocation6 + $0xbc] sm:$0xf]
    %v96 = vunpack.c.l.b16 %v60
    %v97 = vunpack.c.l.b16 %v61
    %v98 = vpack.c.b16 %v97, %v96
    %v132 = vunpack.c.l.b16 %v62
    %v133 = vunpack.c.h.b16 %v62
    %v134 = vunpack.c.l.b16 %v63
    %v135 = vunpack.c.l.b16 %v64
    %v136 = vunpack.c.h.b16 %v64
    %v137 = vunpack.c.l.b16 %v65
    %v138 = vunpack.c.l.b16 %v66
    %v139 = vunpack.c.h.b16 %v66
    %v140 = vunpack.c.l.b16 %v67
    %v141 = vunpack.c.l.b16 %v68
    %v142 = vunpack.c.h.b16 %v68
    %v143 = vunpack.c.l.b16 %v69
    %v144 = vunpack.c.l.b16 %v70
    %v145 = vunpack.c.h.b16 %v70
    %v146 = vunpack.c.l.b16 %v71
    %v147 = vunpack.c.l.b16 %v72
    %v148 = vunpack.c.h.b16 %v72
    %v149 = vunpack.c.l.b16 %v73
    %v150 = vunpack.c.l.b16 %v74
    %v151 = vunpack.c.h.b16 %v74
    %v152 = vunpack.c.l.b16 %v75
    %v153 = vunpack.c.l.b16 %v76
    %v154 = vunpack.c.h.b16 %v76
    %v155 = vunpack.c.l.b16 %v77
    %v156 = vunpack.c.l.b16 %v78
    %v157 = vunpack.c.h.b16 %v78
    %v158 = vunpack.c.l.b16 %v79
    %v159 = vunpack.c.l.b16 %v80
    %v160 = vunpack.c.h.b16 %v80
    %v161 = vunpack.c.l.b16 %v81
    %v162 = vunpack.c.l.b16 %v82
    %v163 = vunpack.c.h.b16 %v82
    %v164 = vunpack.c.l.b16 %v83
    %v165 = vunpack.c.l.b16 %v84
    %v166 = vunpack.c.h.b16 %v84
    %v167 = vunpack.c.l.b16 %v85
    %v168 = vunpack.c.l.b16 %v86
    %v169 = vunpack.c.h.b16 %v86
    %v170 = vunpack.c.l.b16 %v87
    %v171 = vunpack.c.l.b16 %v88
    %v172 = vunpack.c.h.b16 %v88
    %v173 = vunpack.c.l.b16 %v89
    %v174 = vunpack.c.l.b16 %v90
    %v175 = vunpack.c.h.b16 %v90
    %v176 = vunpack.c.l.b16 %v91
    %v177 = vunpack.c.l.b16 %v92
    %v178 = vunpack.c.h.b16 %v92
    %v179 = vunpack.c.l.b16 %v93
    %v180 = vpack.c.b16 %v135, %v132
    %v181 = vpack.c.b16 %v136, %v133
    %v182 = vpack.c.b16 %v137, %v134
    %v183 = vpack.c.b16 %v141, %v138
    %v184 = vpack.c.b16 %v142, %v139
    %v185 = vpack.c.b16 %v143, %v140
    %v186 = vpack.c.b16 %v147, %v144
    %v187 = vpack.c.b16 %v148, %v145
    %v188 = vpack.c.b16 %v149, %v146
    %v189 = vpack.c.b16 %v153, %v150
    %v190 = vpack.c.b16 %v154, %v151
    %v191 = vpack.c.b16 %v155, %v152
    %v192 = vpack.c.b16 %v159, %v156
    %v193 = vpack.c.b16 %v160, %v157
    %v194 = vpack.c.b16 %v161, %v158
    %v195 = vpack.c.b16 %v165, %v162
    %v196 = vpack.c.b16 %v166, %v163
    %v197 = vpack.c.b16 %v167, %v164
    %v198 = vpack.c.b16 %v171, %v168
    %v199 = vpack.c.b16 %v172, %v169
    %v200 = vpack.c.b16 %v173, %v170
    %v201 = vpack.c.b16 %v177, %v174
    %v202 = vpack.c.b16 %v178, %v175
    %v203 = vpack.c.b16 %v179, %v176
    %228 = vmatprep.subr.bf16.mxu0 %v181
    %229 = vmatpush1.bf16.msra.mxu0 %v180
    %230 = vmatprep.subr.bf16.mxu0 %v184
    %231 = vmatpush1.bf16.msra.mxu0 %v183
    %232 = vmatprep.subr.bf16.mxu0 %v187
    %233 = vmatpush1.bf16.msra.mxu0 %v186
    %234 = vmatprep.subr.bf16.mxu0 %v190
    %235 = vmatpush1.bf16.msra.mxu0 %v189
    %236 = vmatprep.subr.bf16.mxu0 %v193
    %237 = vmatpush1.bf16.msra.mxu0 %v192
    %238 = vmatprep.subr.bf16.mxu0 %v196
    %239 = vmatpush1.bf16.msra.mxu0 %v195
    %240 = vmatprep.subr.bf16.mxu0 %v199
    %241 = vmatpush1.bf16.msra.mxu0 %v198
    %242 = vmatprep.subr.bf16.mxu0 %v202
    %243 = vmatpush1.bf16.msra.mxu0 %v201
    %244 = vmatprep.subr.bf16.mxu0 0
    %245 = vmatpush1.bf16.msra.mxu0 0
    %246 = vmatprep.subr.bf16.mxu0 0
    %247 = vmatpush1.bf16.msra.mxu0 0
    %248 = vmatprep.subr.bf16.mxu0 0
    %249 = vmatpush1.bf16.msra.mxu0 0
    %250 = vmatprep.subr.bf16.mxu0 0
    %251 = vmatpush1.bf16.msra.mxu0 0
    %252 = vmatprep.subr.bf16.mxu0 0
    %253 = vmatpush1.bf16.msra.mxu0 0
    %254 = vmatprep.subr.bf16.mxu0 0
    %255 = vmatpush1.bf16.msra.mxu0 0
    %256 = vmatprep.subr.bf16.mxu0 0
    %257 = vmatpush1.bf16.msra.mxu0 0
    %258 = vmatprep.subr.bf16.mxu0 0
    %259 = vmatpush1.bf16.msra.mxu0 0
    %260 = vmatprep.mubr.bf16.mxu0 0
    %261 = vmatmul.mubr.bf16.gmra.mrb[0].mxu0 %v98
    %v262 = vpop.f32.mrb[0].mxu0
    %v263 = vadd.f32 0.0, %v262
    %v264 = vpop.f32.mrb[0].mxu0
    %v265 = vadd.f32 0.0, %v264
    %v266 = vpop.f32.mrb[0].mxu0
    %v267 = vadd.f32 0.0, %v266
    %v268 = vpop.f32.mrb[0].mxu0
    %v269 = vadd.f32 0.0, %v268
    %270 = vdwg.mxu0
    %271 = vmatprep.subr.bf16.mxu0 0
    %272 = vmatpush1.bf16.msra.mxu0 %v182
    %273 = vmatprep.subr.bf16.mxu0 0
    %274 = vmatpush1.bf16.msra.mxu0 %v185
    %275 = vmatprep.subr.bf16.mxu0 0
    %276 = vmatpush1.bf16.msra.mxu0 %v188
    %277 = vmatprep.subr.bf16.mxu0 0
    %278 = vmatpush1.bf16.msra.mxu0 %v191
    %279 = vmatprep.subr.bf16.mxu0 0
    %280 = vmatpush1.bf16.msra.mxu0 %v194
    %281 = vmatprep.subr.bf16.mxu0 0
    %282 = vmatpush1.bf16.msra.mxu0 %v197
    %283 = vmatprep.subr.bf16.mxu0 0
    %284 = vmatpush1.bf16.msra.mxu0 %v200
    %285 = vmatprep.subr.bf16.mxu0 0
    %286 = vmatpush1.bf16.msra.mxu0 %v203
    %287 = vmatprep.subr.bf16.mxu0 0
    %288 = vmatpush1.bf16.msra.mxu0 0
    %289 = vmatprep.subr.bf16.mxu0 0
    %290 = vmatpush1.bf16.msra.mxu0 0
    %291 = vmatprep.subr.bf16.mxu0 0
    %292 = vmatpush1.bf16.msra.mxu0 0
    %293 = vmatprep.subr.bf16.mxu0 0
    %294 = vmatpush1.bf16.msra.mxu0 0
    %295 = vmatprep.subr.bf16.mxu0 0
    %296 = vmatpush1.bf16.msra.mxu0 0
    %297 = vmatprep.subr.bf16.mxu0 0
    %298 = vmatpush1.bf16.msra.mxu0 0
    %299 = vmatprep.subr.bf16.mxu0 0
    %300 = vmatpush1.bf16.msra.mxu0 0
    %301 = vmatprep.subr.bf16.mxu0 0
    %302 = vmatpush1.bf16.msra.mxu0 0
    %303 = vmatprep.mubr.bf16.mxu0 0
    %304 = vmatmul.mubr.bf16.gmra.mrb[0].mxu0 %v98
    %v305 = vpop.f32.mrb[0].mxu0
    %v306 = vadd.f32 0.0, %v305
    %v307 = vpop.f32.mrb[0].mxu0
    %v308 = vpop.f32.mrb[0].mxu0
    %v309 = vadd.f32 0.0, %v308
    %v310 = vpop.f32.mrb[0].mxu0
    %311 = vdwg.mxu0
    %v312 = vadd.f32 %v54, %v263
    %v313 = vadd.f32 %v55, %v265
    %v314 = vadd.f32 %v56, %v306
    %v315 = vadd.f32 %v57, %v267
    %v316 = vadd.f32 %v58, %v269
    %v317 = vadd.f32 %v59, %v309
    %318 = vst [vmem:[#allocation2] sm:$0xff] %v312
    %319 = vst [vmem:[#allocation2 + $0x8] sm:$0xff] %v313
    %320 = vst [vmem:[#allocation2 + $0x10] sm:$0xff] %v314
    %321 = vst [vmem:[#allocation2 + $0x18] sm:$0xff] %v315
    %322 = vst [vmem:[#allocation2 + $0x20] sm:$0xff] %v316
    %323 = vst [vmem:[#allocation2 + $0x28] sm:$0xff] %v317
    // Predicated region
    $region26: #{tpu_custom_call.1} parent=1 // pred_check
      %p324 = pneg %p44
    $region27: #{tpu_custom_call.1} parent=1 // pred_check_branch
      %326 = sbr.rel (%p324) target = $region29
    $region28: #{tpu_custom_call.1} parent=1 // pred_region
      %v327 = vld [vmem:[#allocation2] sm:$0xff]
      %v328 = vld [vmem:[#allocation2 + $0x8] sm:$0xff]
      %v329 = vld [vmem:[#allocation2 + $0x10] sm:$0xff]
      %v330 = vld [vmem:[#allocation2 + $0x18] sm:$0xff]
      %v331 = vld [vmem:[#allocation2 + $0x20] sm:$0xff]
      %v332 = vld [vmem:[#allocation2 + $0x28] sm:$0xff]
      %v333 = vld [vmem:[%s2] sm:$0x7]
      %v335 = vlaneseq
      %v336 = vshrl.u32 %v335, 7
      %v337 = vsub.s32 0, %v336
      %v338 = vrot.slane %v333, %v337
      %v339 = vlaneseq
      %v340 = vshrl.u32 %v339, 7
      %v341 = vsub.s32 1, %v340
      %v342 = vrot.slane %v333, %v341
      %v343 = vlaneseq
      %v344 = vshrl.u32 %v343, 7
      %v345 = vsub.s32 2, %v344
      %v346 = vrot.slane %v333, %v345
      %v350 = vadd.f32 %v327, %v338
      %v351 = vadd.f32 %v328, %v342
      %v352 = vadd.f32 %v329, %v346
      %v353 = vadd.f32 %v330, %v338
      %v354 = vadd.f32 %v331, %v342
      %v355 = vadd.f32 %v332, %v346
      %v356 = vpack.c.bf16 %v353, %v350
      %v357 = vpack.c.bf16 %v354, %v351
      %v358 = vpack.c.bf16 %v355, %v352
      %v362 = vunpack.c.l.b16 %v356
      %v363 = vunpack.c.l.b16 %v357
      %v364 = vunpack.c.l.b16 %v358
      %v365 = vunpack.c.h.b16 %v356
      %v366 = vunpack.c.h.b16 %v357
      %v367 = vunpack.c.h.b16 %v358
      %v368 = vpack.c.b16 %v363, %v362
      %v369 = vpack.c.b16 %v364, %v364
      %v370 = vpack.c.b16 %v366, %v365
      %v371 = vpack.c.b16 %v367, %v367
      %376 = vst [vmem:[#allocation8] sm:$0xff] %v368
      %377 = vst [vmem:[#allocation8 + $0x8] sm:$0xf] %v369
      %378 = vst [vmem:[#allocation8 + $0xc] sm:$0xff] %v370
      %379 = vst [vmem:[#allocation8 + $0x14] sm:$0xf] %v371
    $region29: #{tpu_custom_call.1} parent=1 // pred_fallthru
      _
    // Predicated region
    $region30: #{tpu_custom_call.1} parent=1 // pred_check
      _
    $region31: #{tpu_custom_call.1} parent=1 // pred_check_branch
      %381 = sbr.rel (0) target = $region33
    $region32: #{tpu_custom_call.1} parent=1 // pred_region
      %s383 = ssub.s32 384, 384
      %384 = vsyncadd [#allocation5], %s383
      %s385 = sshll.u32 [#allocation8], 4
      %s386 = int_to_ptr.vmem [resolvable:$true] %s385
      %391 = dma.vmem_to_hbm [thread:$0]  %s386, 384, %s3, [#allocation5], 192, 192, 12
    $region33: #{tpu_custom_call.1} parent=1 // pred_fallthru
      _
    // Predicated region
    $region34: #{tpu_custom_call.1} parent=1 // pred_check
      _
    $region35: #{tpu_custom_call.1} parent=1 // pred_check_branch
      %393 = sbr.rel (0) target = $region37
    $region36: #{tpu_custom_call.1} parent=1 // pred_region
      %394 = dma.done [#allocation5], 384
    $region37: #{tpu_custom_call.1} parent=1 // pred_fallthru
      _
    %395 = vsyncpa [#allocation4], 1
    %396 = vsyncpa [#allocation7], 1
    %397 = vsyncpa [#allocation5], 1

</llo_original>
